<compile_context>
chip_gen: v5e
topology: v5e:2x2
jax: 0.10.0
libtpu: 0.0.40
codegen_flags: <defaults>
</compile_context>

<pallas_src>
import jax
import jax.numpy as jnp
from jax.experimental import pallas as pl
from jax.experimental.pallas import tpu as pltpu


def pidnn_kernel(x_ref, w1_ref, b1_ref, w2_ref, b2_ref, w3_ref, b3_ref, o_ref):
    # x_ref : [2, T]   compute dtype (feature-major batch tile, lane-dense)
    # w1_ref: [64, 2]  compute dtype, b1_ref: [64, 1] compute dtype
    # w2_ref: [64, 64] bf16,          b2_ref: [64, 1] compute dtype
    # w3_ref: [2, 64]  bf16,          b3_ref: [2, 1]  f32
    # o_ref : [2, T]   f32
    x = x_ref[...]                                   # [2, T]
    w1 = w1_ref[...]                                 # [64, 2]

    # fc1 + relu on the VPU: K=2 on the MXU is pure pipeline fill/drain, so use two
    # broadcast multiply-adds (outer-product style). Runs in the compute dtype
    # (bf16 on v6e/v7x -> half the VALU vregs).
    h1 = w1[:, 0:1] * x[0:1, :] + w1[:, 1:2] * x[1:2, :] + b1_ref[...]
    h1 = jnp.maximum(h1, 0)                          # [64, T]

    # dropout(p=0.3) is identity in eval/inference mode.

    # fc2 on the MXU: bf16 operands, f32 accumulation; bias-add + ReLU in the compute dtype
    # (ReLU commutes with the round-to-bf16).
    h2 = jnp.dot(w2_ref[...], h1.astype(jnp.bfloat16),
                 preferred_element_type=jnp.float32)
    h2 = jnp.maximum(h2.astype(b2_ref.dtype) + b2_ref[...], 0)   # [64, T]

    # fc3 on the MXU; bias add in f32 (only 2 rows).
    out = jnp.dot(w3_ref[...], h2.astype(jnp.bfloat16),
                  preferred_element_type=jnp.float32) + b3_ref[...]
    o_ref[...] = out.astype(o_ref.dtype)             # [2, T]


def _round_up(n, m):
    return (n + m - 1) // m * m


def _default_compute_dtype():
    """bf16 elementwise where the VPU has a bf16 VALU (v6e/v7x), f32 otherwise (v5e & older)."""
    try:
        kind = jax.devices()[0].device_kind.lower()
    except Exception:
        return jnp.bfloat16
    if any(v in kind for v in ("v2", "v3", "v4", "v5")):
        return jnp.float32
    return jnp.bfloat16


def pidnn_forward(x, params, *, tile_b=8192, compute_dtype=None):
    """Forward pass of PIDNN.

    x: [B, 2] (PyTorch row-major batch). params are in PyTorch layout: w [out, in], b [out].
    tile_b: batch tile (lane axis); 8192 amortizes per-step overhead and fits v5e's VMEM;
            16384 is fine on v6e/v7x for very large batches.
    """
    w1, b1, w2, b2, w3, b3 = params
    B = x.shape[0]
    if compute_dtype is None:
        compute_dtype = _default_compute_dtype()
    cd = compute_dtype

    # Lane-aligned tile, clamped for small batches; no padding of B — Pallas masks the
    # partial last block (all in-kernel math is per-lane along the batch axis).
    tb = min(_round_up(tile_b, 128), _round_up(B, 128))
    grid = (pl.cdiv(B, tb),)

    # Feature-major input (batch on the 128-lane axis), streamed in the compute dtype.
    xt = jnp.transpose(x).astype(cd)                 # [2, B]

    # Weight / bias preprocessing (layout + dtype only; math unchanged).
    w1_c = w1.astype(cd)                             # [64, 2]
    b1_c = b1.reshape(64, 1).astype(cd)
    w2_b = w2.astype(jnp.bfloat16)                   # [64, 64]
    b2_c = b2.reshape(64, 1).astype(cd)
    w3_b = w3.astype(jnp.bfloat16)                   # [2, 64]
    b3_c = b3.reshape(2, 1).astype(jnp.float32)

    operands = (xt, w1_c, b1_c, w2_b, b2_c, w3_b, b3_c)
    flops = int(2 * B * (2 * 64 + 64 * 64 + 64 * 2) + 3 * B * 64)
    bytes_accessed = int(sum(a.size * a.dtype.itemsize for a in operands) + 2 * B * 4)

    out_t = pl.pallas_call(
        pidnn_kernel,
        out_shape=jax.ShapeDtypeStruct((2, B), jnp.float32),
        grid_spec=pltpu.PrefetchScalarGridSpec(
            num_scalar_prefetch=0,
            grid=grid,
            in_specs=[
                pl.BlockSpec((2, tb), lambda i: (0, i)),     # x tile (streamed)
                pl.BlockSpec((64, 2), lambda i: (0, 0)),     # w1 (VMEM-resident)
                pl.BlockSpec((64, 1), lambda i: (0, 0)),     # b1
                pl.BlockSpec((64, 64), lambda i: (0, 0)),    # w2
                pl.BlockSpec((64, 1), lambda i: (0, 0)),     # b2
                pl.BlockSpec((2, 64), lambda i: (0, 0)),     # w3
                pl.BlockSpec((2, 1), lambda i: (0, 0)),      # b3
            ],
            out_specs=pl.BlockSpec((2, tb), lambda i: (0, i)),
        ),
        compiler_params=pltpu.CompilerParams(
            dimension_semantics=("parallel",),               # lets v7x shard the batch grid
            vmem_limit_bytes=32 * 1024 * 1024,
        ),
        cost_estimate=pl.CostEstimate(flops=flops, transcendentals=0,
                                      bytes_accessed=bytes_accessed),
    )(*operands)

    # Back to [B, 2] row-major batch.
    return jnp.transpose(out_t)


def init_params(key):
    """Deterministic init mirroring nn.Linear (PyTorch layout: w [out, in], b [out])."""
    k1, k2, k3, k4, k5, k6 = jax.random.split(key, 6)

    def uniform(k, shape, fan_in):
        bound = 1.0 / jnp.sqrt(fan_in)
        return jax.random.uniform(k, shape, jnp.float32, -bound, bound)

    w1 = uniform(k1, (64, 2), 2)      # fc1: Linear(2, 64)
    b1 = uniform(k2, (64,), 2)
    w2 = uniform(k3, (64, 64), 64)    # fc2: Linear(64, 64)
    b2 = uniform(k4, (64,), 64)
    w3 = uniform(k5, (2, 64), 64)     # fc3: Linear(64, 2)
    b3 = uniform(k6, (2,), 64)
    return (w1, b1, w2, b2, w3, b3)


def pidnn_ref_f32(x, params):
    """Pure-f32 reference (exact PyTorch-module math, eval mode)."""
    w1, b1, w2, b2, w3, b3 = params
    h = jnp.maximum(x @ w1.T + b1, 0.0)
    h = jnp.maximum(h @ w2.T + b2, 0.0)
    return h @ w3.T + b3


def pidnn_ref_matched(x, params, compute_dtype):
    """Precision-matched reference mirroring the kernel's dtype choices step by step."""
    w1, b1, w2, b2, w3, b3 = params
    cd = compute_dtype
    xc = x.astype(cd)                                    # [B, 2]
    w1c = w1.astype(cd)                                  # [64, 2]
    h1 = jnp.maximum(xc[:, 0:1] * w1c[:, 0][None, :]
                     + xc[:, 1:2] * w1c[:, 1][None, :]
                     + b1.astype(cd)[None, :], 0)        # [B, 64]
    h2 = jnp.dot(h1.astype(jnp.bfloat16), w2.T.astype(jnp.bfloat16),
                 preferred_element_type=jnp.float32)
    h2 = jnp.maximum(h2.astype(cd) + b2.astype(cd)[None, :], 0)
    out = jnp.dot(h2.astype(jnp.bfloat16), w3.T.astype(jnp.bfloat16),
                  preferred_element_type=jnp.float32) + b3[None, :]
    return out


if __name__ == "__main__":
    key = jax.random.PRNGKey(0)
    pkey, xkey, xkey2 = jax.random.split(key, 3)
    params = init_params(pkey)
    cd = _default_compute_dtype()
    tol = 2e-3 if cd == jnp.float32 else 2e-2

    # Small batch (single, partial block).
    B = 8
    x = jax.random.normal(xkey, (B, 2), dtype=jnp.float32)
    out = jax.block_until_ready(pidnn_forward(x, params, compute_dtype=cd))
    assert out.shape == (B, 2)

    ref_m = pidnn_ref_matched(x, params, cd)
    assert jnp.allclose(out, ref_m, atol=tol, rtol=tol), "mismatch vs matched reference"
    ref_f = pidnn_ref_f32(x, params)
    assert jnp.allclose(out, ref_f, atol=5e-2, rtol=5e-2), "mismatch vs f32 reference"

    # Multi-step grid with a ragged (masked) last block — exercises the no-padding path.
    B2 = 300
    x2 = jax.random.normal(xkey2, (B2, 2), dtype=jnp.float32)
    out2 = jax.block_until_ready(pidnn_forward(x2, params, tile_b=128, compute_dtype=cd))
    assert out2.shape == (B2, 2)
    assert jnp.allclose(out2, pidnn_ref_matched(x2, params, cd), atol=tol, rtol=tol), \
        "mismatch vs matched reference (ragged multi-block)"

    print("KERNEL_OK")
</pallas_src>

<mosaic_0001>
module attributes {stable_mosaic.version = 11 : i64} {
  func.func @pidnn_kernel(%arg0: i32, %arg1: memref<2x128xbf16, #tpu.memory_space<vmem>>, %arg2: memref<64x2xbf16, #tpu.memory_space<vmem>>, %arg3: memref<64x1xbf16, #tpu.memory_space<vmem>>, %arg4: memref<64x64xbf16, #tpu.memory_space<vmem>>, %arg5: memref<64x1xbf16, #tpu.memory_space<vmem>>, %arg6: memref<2x64xbf16, #tpu.memory_space<vmem>>, %arg7: memref<2x1xf32, #tpu.memory_space<vmem>>, %arg8: memref<2x128xf32, #tpu.memory_space<vmem>>) attributes {dimension_semantics = [#tpu.dimension_semantics<parallel>], iteration_bounds = array<i64: 1>, scalar_prefetch = 0 : i64, scratch_operands = 0 : i64, tpu.core_type = #tpu.core_type<tc>, window_params = [{transform_indices = @transform_0, window_bounds = array<i64: 2, 128>}, {pipeline_mode = #tpu.pipeline_mode<synchronous>, transform_indices = @transform_1, window_bounds = array<i64: 64, 2>}, {pipeline_mode = #tpu.pipeline_mode<synchronous>, transform_indices = @transform_2, window_bounds = array<i64: 64, 1>}, {pipeline_mode = #tpu.pipeline_mode<synchronous>, transform_indices = @transform_3, window_bounds = array<i64: 64, 64>}, {pipeline_mode = #tpu.pipeline_mode<synchronous>, transform_indices = @transform_4, window_bounds = array<i64: 64, 1>}, {pipeline_mode = #tpu.pipeline_mode<synchronous>, transform_indices = @transform_5, window_bounds = array<i64: 2, 64>}, {pipeline_mode = #tpu.pipeline_mode<synchronous>, transform_indices = @transform_6, window_bounds = array<i64: 2, 1>}, {transform_indices = @transform_7, window_bounds = array<i64: 2, 128>}]} {
    %c0 = arith.constant 0 : index
    %c0_0 = arith.constant 0 : index
    %0 = vector.load %arg1[%c0, %c0_0] : memref<2x128xbf16, #tpu.memory_space<vmem>>, vector<2x128xbf16>
    %c0_1 = arith.constant 0 : index
    %c0_2 = arith.constant 0 : index
    %1 = vector.load %arg2[%c0_1, %c0_2] : memref<64x2xbf16, #tpu.memory_space<vmem>>, vector<64x2xbf16>
    %2 = vector.extract_strided_slice %1 {offsets = [0, 0], sizes = [64, 1], strides = [1, 1]} : vector<64x2xbf16> to vector<64x1xbf16>
    %3 = vector.extract_strided_slice %0 {offsets = [0, 0], sizes = [1, 128], strides = [1, 1]} : vector<2x128xbf16> to vector<1x128xbf16>
    %4 = vector.broadcast %2 : vector<64x1xbf16> to vector<64x128xbf16>
    %5 = vector.broadcast %3 : vector<1x128xbf16> to vector<64x128xbf16>
    %6 = arith.mulf %4, %5 : vector<64x128xbf16>
    %7 = vector.extract_strided_slice %1 {offsets = [0, 1], sizes = [64, 1], strides = [1, 1]} : vector<64x2xbf16> to vector<64x1xbf16>
    %8 = vector.extract_strided_slice %0 {offsets = [1, 0], sizes = [1, 128], strides = [1, 1]} : vector<2x128xbf16> to vector<1x128xbf16>
    %9 = vector.broadcast %7 : vector<64x1xbf16> to vector<64x128xbf16>
    %10 = vector.broadcast %8 : vector<1x128xbf16> to vector<64x128xbf16>
    %11 = arith.mulf %9, %10 : vector<64x128xbf16>
    %12 = arith.addf %6, %11 : vector<64x128xbf16>
    %c0_3 = arith.constant 0 : index
    %c0_4 = arith.constant 0 : index
    %13 = vector.load %arg3[%c0_3, %c0_4] : memref<64x1xbf16, #tpu.memory_space<vmem>>, vector<64x1xbf16>
    %14 = vector.broadcast %13 : vector<64x1xbf16> to vector<64x128xbf16>
    %15 = arith.addf %12, %14 : vector<64x128xbf16>
    %cst = arith.constant 0.000000e+00 : bf16
    %16 = vector.broadcast %cst : bf16 to vector<64x128xbf16>
    %17 = arith.maximumf %15, %16 : vector<64x128xbf16>
    %c0_5 = arith.constant 0 : index
    %c0_6 = arith.constant 0 : index
    %18 = vector.load %arg4[%c0_5, %c0_6] : memref<64x64xbf16, #tpu.memory_space<vmem>>, vector<64x64xbf16>
    %cst_7 = arith.constant dense<0.000000e+00> : vector<64x128xf32>
    %19 = tpu.matmul %18, %17, %cst_7 {dimension_numbers = #tpu.dot_dimension_numbers<[1], [0], [0], [1], [0, 0, 1, 1], [], []>} : vector<64x64xbf16>, vector<64x128xbf16>, vector<64x128xf32> -> vector<64x128xf32>
    %20 = arith.truncf %19 : vector<64x128xf32> to vector<64x128xbf16>
    %c0_8 = arith.constant 0 : index
    %c0_9 = arith.constant 0 : index
    %21 = vector.load %arg5[%c0_8, %c0_9] : memref<64x1xbf16, #tpu.memory_space<vmem>>, vector<64x1xbf16>
    %22 = vector.broadcast %21 : vector<64x1xbf16> to vector<64x128xbf16>
    %23 = arith.addf %20, %22 : vector<64x128xbf16>
    %cst_10 = arith.constant 0.000000e+00 : bf16
    %24 = vector.broadcast %cst_10 : bf16 to vector<64x128xbf16>
    %25 = arith.maximumf %23, %24 : vector<64x128xbf16>
    %c0_11 = arith.constant 0 : index
    %c0_12 = arith.constant 0 : index
    %26 = vector.load %arg6[%c0_11, %c0_12] : memref<2x64xbf16, #tpu.memory_space<vmem>>, vector<2x64xbf16>
    %cst_13 = arith.constant dense<0.000000e+00> : vector<2x128xf32>
    %27 = tpu.matmul %26, %25, %cst_13 {dimension_numbers = #tpu.dot_dimension_numbers<[1], [0], [0], [1], [0, 0, 1, 1], [], []>} : vector<2x64xbf16>, vector<64x128xbf16>, vector<2x128xf32> -> vector<2x128xf32>
    %c0_14 = arith.constant 0 : index
    %c0_15 = arith.constant 0 : index
    %28 = vector.load %arg7[%c0_14, %c0_15] : memref<2x1xf32, #tpu.memory_space<vmem>>, vector<2x1xf32>
    %29 = vector.broadcast %28 : vector<2x1xf32> to vector<2x128xf32>
    %30 = arith.addf %27, %29 : vector<2x128xf32>
    %c0_16 = arith.constant 0 : index
    %c0_17 = arith.constant 0 : index
    %31 = vector.load %arg8[%c0_16, %c0_17] : memref<2x128xf32, #tpu.memory_space<vmem>>, vector<2x128xf32>
    tpu.vector_store %arg8[%c0_16, %c0_17], %30 {strides = array<i32>} : memref<2x128xf32, #tpu.memory_space<vmem>>, vector<2x128xf32>,
    return
  }
  func.func @transform_0(%arg0: i32) -> (i32, i32) {
    %c0_i32 = arith.constant 0 : i32
    %c0_i32_0 = arith.constant 0 : i32
    return %c0_i32, %arg0 : i32, i32
  }
  func.func @transform_1(%arg0: i32) -> (i32, i32) {
    %c0_i32 = arith.constant 0 : i32
    %c0_i32_0 = arith.constant 0 : i32
    %c0_i32_1 = arith.constant 0 : i32
    return %c0_i32, %c0_i32_0 : i32, i32
  }
  func.func @transform_2(%arg0: i32) -> (i32, i32) {
    %c0_i32 = arith.constant 0 : i32
    %c0_i32_0 = arith.constant 0 : i32
    %c0_i32_1 = arith.constant 0 : i32
    return %c0_i32, %c0_i32_0 : i32, i32
  }
  func.func @transform_3(%arg0: i32) -> (i32, i32) {
    %c0_i32 = arith.constant 0 : i32
    %c0_i32_0 = arith.constant 0 : i32
    %c0_i32_1 = arith.constant 0 : i32
    return %c0_i32, %c0_i32_0 : i32, i32
  }
  func.func @transform_4(%arg0: i32) -> (i32, i32) {
    %c0_i32 = arith.constant 0 : i32
    %c0_i32_0 = arith.constant 0 : i32
    %c0_i32_1 = arith.constant 0 : i32
    return %c0_i32, %c0_i32_0 : i32, i32
  }
  func.func @transform_5(%arg0: i32) -> (i32, i32) {
    %c0_i32 = arith.constant 0 : i32
    %c0_i32_0 = arith.constant 0 : i32
    %c0_i32_1 = arith.constant 0 : i32
    return %c0_i32, %c0_i32_0 : i32, i32
  }
  func.func @transform_6(%arg0: i32) -> (i32, i32) {
    %c0_i32 = arith.constant 0 : i32
    %c0_i32_0 = arith.constant 0 : i32
    %c0_i32_1 = arith.constant 0 : i32
    return %c0_i32, %c0_i32_0 : i32, i32
  }
  func.func @transform_7(%arg0: i32) -> (i32, i32) {
    %c0_i32 = arith.constant 0 : i32
    %c0_i32_0 = arith.constant 0 : i32
    return %c0_i32, %arg0 : i32, i32
  }
}

</mosaic_0001>

<llo_original>
// kernel: tpu_custom_call.1
$region0: #{tpu_custom_call.1}
  #allocation0 [shape = 'u32[]', space=smem, size = 0x4, offset = 0x4, fixed_abs, tag = 'smem constant byte address 0x4 - core index']
  #allocation1 [shape = 'u32[72,128]{1,0:T(1,128)}', space=vmem, size = 0x9000, scoped, tag = 'internal scratch']
  %s0 = inlined_call_operand.vmem [shape: bf16[2,8], index: 0, kind: input, shape index: {}]
  %s1 = inlined_call_operand.vmem [shape: bf16[64,2], index: 1, kind: input, shape index: {}]
  %s2 = inlined_call_operand.vmem [shape: bf16[64,1], index: 2, kind: input, shape index: {}]
  %s3 = inlined_call_operand.vmem [shape: bf16[64,64], index: 3, kind: input, shape index: {}]
  %s4 = inlined_call_operand.vmem [shape: bf16[64,1], index: 4, kind: input, shape index: {}]
  %s5 = inlined_call_operand.vmem [shape: bf16[2,64], index: 5, kind: input, shape index: {}]
  %s6 = inlined_call_operand.vmem [shape: f32[2,1], index: 6, kind: input, shape index: {}]
  %s7 = inlined_call_operand.hbm [shape: f32[2,8], index: 7, kind: output, shape index: {}]
  %s8 = sld [smem:[#allocation0]]
  $region38: #{tpu_custom_call.1} parent=0
    _
  %s10 = ssub.s32 1, %s8
  %s11 = scalar_select 0, %s10, %s8
  $region1: #{tpu_custom_call.1} parent=0
    #allocation2 [shape = 'u8[1024]{0}', space=vmem, size = 0x400, scoped, tag = 'output window, operand 0, single buffered']
    #allocation3 [shape = 's32[1]{0}', space=sflag, size = 0x4, scoped, tag = 'scoped memory for tpu_custom_call.1']
    %12 = vsyncpa [#allocation3], 0
    // Predicated region
    $region2: #{tpu_custom_call.1} parent=1 // pred_check
      _
    $region3: #{tpu_custom_call.1} parent=1 // pred_check_branch
      %14 = sbr.rel (0) target = $region5
    $region4: #{tpu_custom_call.1} parent=1 // pred_region
      _
    $region5: #{tpu_custom_call.1} parent=1 // pred_fallthru
      _
    // Predicated region
    $region6: #{tpu_custom_call.1} parent=1 // pred_check
      _
    $region7: #{tpu_custom_call.1} parent=1 // pred_check_branch
      %16 = sbr.rel (0) target = $region9
    $region8: #{tpu_custom_call.1} parent=1 // pred_region
      _
    $region9: #{tpu_custom_call.1} parent=1 // pred_fallthru
      _
    // Predicated region
    $region10: #{tpu_custom_call.1} parent=1 // pred_check
      _
    $region11: #{tpu_custom_call.1} parent=1 // pred_check_branch
      %18 = sbr.rel (0) target = $region13
    $region12: #{tpu_custom_call.1} parent=1 // pred_region
      _
    $region13: #{tpu_custom_call.1} parent=1 // pred_fallthru
      _
    // Predicated region
    $region14: #{tpu_custom_call.1} parent=1 // pred_check
      _
    $region15: #{tpu_custom_call.1} parent=1 // pred_check_branch
      %20 = sbr.rel (0) target = $region17
    $region16: #{tpu_custom_call.1} parent=1 // pred_region
      _
    $region17: #{tpu_custom_call.1} parent=1 // pred_fallthru
      _
    // Predicated region
    $region18: #{tpu_custom_call.1} parent=1 // pred_check
      _
    $region19: #{tpu_custom_call.1} parent=1 // pred_check_branch
      %22 = sbr.rel (0) target = $region21
    $region20: #{tpu_custom_call.1} parent=1 // pred_region
      _
    $region21: #{tpu_custom_call.1} parent=1 // pred_fallthru
      _
    // Predicated region
    $region22: #{tpu_custom_call.1} parent=1 // pred_check
      _
    $region23: #{tpu_custom_call.1} parent=1 // pred_check_branch
      %24 = sbr.rel (0) target = $region25
    $region24: #{tpu_custom_call.1} parent=1 // pred_region
      _
    $region25: #{tpu_custom_call.1} parent=1 // pred_fallthru
      _
    // Predicated region
    $region26: #{tpu_custom_call.1} parent=1 // pred_check
      _
    $region27: #{tpu_custom_call.1} parent=1 // pred_check_branch
      %26 = sbr.rel (0) target = $region29
    $region28: #{tpu_custom_call.1} parent=1 // pred_region
      _
    $region29: #{tpu_custom_call.1} parent=1 // pred_fallthru
      _
    %v28 = vld [vmem:[%s0] sm:$0x1]
    %v29 = vld [vmem:[%s1] sm:$0xf]
    %v30 = vld [vmem:[%s1 + $0x4] sm:$0xf]
    %v31 = vld [vmem:[%s1 + $0x8] sm:$0xf]
    %v32 = vld [vmem:[%s1 + $0xc] sm:$0xf]
    %v33 = vld [vmem:[%s1 + $0x10] sm:$0xf]
    %v34 = vld [vmem:[%s1 + $0x14] sm:$0xf]
    %v35 = vld [vmem:[%s1 + $0x18] sm:$0xf]
    %v36 = vld [vmem:[%s1 + $0x1c] sm:$0xf]
    %38 = vset.pattern.permute.xlu0 0
    %39 = vperm.xlu0 %38, %v29
    %v40 = vpop.permute.xlu0 %39
    %v43 = vunpack.c.l.s4 839922192
    %v44 = vunpack.c.0.s8 %v43
    %v45 = vperm.slane %v40, %v44
    %47 = vset.pattern.permute.xlu0 0
    %48 = vperm.xlu0 %47, %v30
    %v49 = vpop.permute.xlu0 %48
    %v52 = vunpack.c.l.s4 839922192
    %v53 = vunpack.c.0.s8 %v52
    %v54 = vperm.slane %v49, %v53
    %56 = vset.pattern.permute.xlu0 0
    %57 = vperm.xlu0 %56, %v31
    %v58 = vpop.permute.xlu0 %57
    %v61 = vunpack.c.l.s4 839922192
    %v62 = vunpack.c.0.s8 %v61
    %v63 = vperm.slane %v58, %v62
    %65 = vset.pattern.permute.xlu0 0
    %66 = vperm.xlu0 %65, %v32
    %v67 = vpop.permute.xlu0 %66
    %v70 = vunpack.c.l.s4 839922192
    %v71 = vunpack.c.0.s8 %v70
    %v72 = vperm.slane %v67, %v71
    %74 = vset.pattern.permute.xlu0 0
    %75 = vperm.xlu0 %74, %v33
    %v76 = vpop.permute.xlu0 %75
    %v79 = vunpack.c.l.s4 839922192
    %v80 = vunpack.c.0.s8 %v79
    %v81 = vperm.slane %v76, %v80
    %83 = vset.pattern.permute.xlu0 0
    %84 = vperm.xlu0 %83, %v34
    %v85 = vpop.permute.xlu0 %84
    %v88 = vunpack.c.l.s4 839922192
    %v89 = vunpack.c.0.s8 %v88
    %v90 = vperm.slane %v85, %v89
    %92 = vset.pattern.permute.xlu0 0
    %93 = vperm.xlu0 %92, %v35
    %v94 = vpop.permute.xlu0 %93
    %v97 = vunpack.c.l.s4 839922192
    %v98 = vunpack.c.0.s8 %v97
    %v99 = vperm.slane %v94, %v98
    %101 = vset.pattern.permute.xlu0 0
    %102 = vperm.xlu0 %101, %v36
    %v103 = vpop.permute.xlu0 %102
    %v106 = vunpack.c.l.s4 839922192
    %v107 = vunpack.c.0.s8 %v106
    %v108 = vperm.slane %v103, %v107
    %v110 = vpack.i.b16 %v28, %v28
    %v112 = vperm.slane %v110, 0
    %v113 = vunpack.c.l.bf16 %v45
    %v114 = vunpack.c.l.bf16 %v54
    %v115 = vunpack.c.l.bf16 %v63
    %v116 = vunpack.c.l.bf16 %v72
    %v117 = vunpack.c.l.bf16 %v81
    %v118 = vunpack.c.l.bf16 %v90
    %v119 = vunpack.c.l.bf16 %v99
    %v120 = vunpack.c.l.bf16 %v108
    %v121 = vunpack.c.l.bf16 %v112
    %v122 = vmul.f32 %v113, %v121
    %v123 = vmul.f32 %v114, %v121
    %v124 = vmul.f32 %v115, %v121
    %v125 = vmul.f32 %v116, %v121
    %v126 = vmul.f32 %v117, %v121
    %v127 = vmul.f32 %v118, %v121
    %v128 = vmul.f32 %v119, %v121
    %v129 = vmul.f32 %v120, %v121
    %v130 = vpack.c.bf16 %v122, %v122
    %v131 = vpack.c.bf16 %v123, %v123
    %v132 = vpack.c.bf16 %v124, %v124
    %v133 = vpack.c.bf16 %v125, %v125
    %v134 = vpack.c.bf16 %v126, %v126
    %v135 = vpack.c.bf16 %v127, %v127
    %v136 = vpack.c.bf16 %v128, %v128
    %v137 = vpack.c.bf16 %v129, %v129
    %138 = vset.pattern.permute.xlu0 1
    %139 = vperm.xlu0 %138, %v29
    %v140 = vpop.permute.xlu0 %139
    %v143 = vunpack.c.l.s4 839922192
    %v144 = vunpack.c.0.s8 %v143
    %v145 = vperm.slane %v140, %v144
    %146 = vset.pattern.permute.xlu0 1
    %147 = vperm.xlu0 %146, %v30
    %v148 = vpop.permute.xlu0 %147
    %v151 = vunpack.c.l.s4 839922192
    %v152 = vunpack.c.0.s8 %v151
    %v153 = vperm.slane %v148, %v152
    %154 = vset.pattern.permute.xlu0 1
    %155 = vperm.xlu0 %154, %v31
    %v156 = vpop.permute.xlu0 %155
    %v159 = vunpack.c.l.s4 839922192
    %v160 = vunpack.c.0.s8 %v159
    %v161 = vperm.slane %v156, %v160
    %162 = vset.pattern.permute.xlu0 1
    %163 = vperm.xlu0 %162, %v32
    %v164 = vpop.permute.xlu0 %163
    %v167 = vunpack.c.l.s4 839922192
    %v168 = vunpack.c.0.s8 %v167
    %v169 = vperm.slane %v164, %v168
    %170 = vset.pattern.permute.xlu0 1
    %171 = vperm.xlu0 %170, %v33
    %v172 = vpop.permute.xlu0 %171
    %v175 = vunpack.c.l.s4 839922192
    %v176 = vunpack.c.0.s8 %v175
    %v177 = vperm.slane %v172, %v176
    %178 = vset.pattern.permute.xlu0 1
    %179 = vperm.xlu0 %178, %v34
    %v180 = vpop.permute.xlu0 %179
    %v183 = vunpack.c.l.s4 839922192
    %v184 = vunpack.c.0.s8 %v183
    %v185 = vperm.slane %v180, %v184
    %186 = vset.pattern.permute.xlu0 1
    %187 = vperm.xlu0 %186, %v35
    %v188 = vpop.permute.xlu0 %187
    %v191 = vunpack.c.l.s4 839922192
    %v192 = vunpack.c.0.s8 %v191
    %v193 = vperm.slane %v188, %v192
    %194 = vset.pattern.permute.xlu0 1
    %195 = vperm.xlu0 %194, %v36
    %v196 = vpop.permute.xlu0 %195
    %v199 = vunpack.c.l.s4 839922192
    %v200 = vunpack.c.0.s8 %v199
    %v201 = vperm.slane %v196, %v200
    %v202 = vshrl.u32 %v28, 16
    %v203 = vpack.i.b16 %v202, %v202
    %v205 = vperm.slane %v203, 0
    %v206 = vunpack.c.l.bf16 %v145
    %v207 = vunpack.c.l.bf16 %v153
    %v208 = vunpack.c.l.bf16 %v161
    %v209 = vunpack.c.l.bf16 %v169
    %v210 = vunpack.c.l.bf16 %v177
    %v211 = vunpack.c.l.bf16 %v185
    %v212 = vunpack.c.l.bf16 %v193
    %v213 = vunpack.c.l.bf16 %v201
    %v214 = vunpack.c.l.bf16 %v205
    %v215 = vmul.f32 %v206, %v214
    %v216 = vmul.f32 %v207, %v214
    %v217 = vmul.f32 %v208, %v214
    %v218 = vmul.f32 %v209, %v214
    %v219 = vmul.f32 %v210, %v214
    %v220 = vmul.f32 %v211, %v214
    %v221 = vmul.f32 %v212, %v214
    %v222 = vmul.f32 %v213, %v214
    %v223 = vpack.c.bf16 %v215, %v215
    %v224 = vpack.c.bf16 %v216, %v216
    %v225 = vpack.c.bf16 %v217, %v217
    %v226 = vpack.c.bf16 %v218, %v218
    %v227 = vpack.c.bf16 %v219, %v219
    %v228 = vpack.c.bf16 %v220, %v220
    %v229 = vpack.c.bf16 %v221, %v221
    %v230 = vpack.c.bf16 %v222, %v222
    %v231 = vunpack.c.l.bf16 %v130
    %v232 = vunpack.c.l.bf16 %v131
    %v233 = vunpack.c.l.bf16 %v132
    %v234 = vunpack.c.l.bf16 %v133
    %v235 = vunpack.c.l.bf16 %v134
    %v236 = vunpack.c.l.bf16 %v135
    %v237 = vunpack.c.l.bf16 %v136
    %v238 = vunpack.c.l.bf16 %v137
    %v239 = vunpack.c.l.bf16 %v223
    %v240 = vunpack.c.l.bf16 %v224
    %v241 = vunpack.c.l.bf16 %v225
    %v242 = vunpack.c.l.bf16 %v226
    %v243 = vunpack.c.l.bf16 %v227
    %v244 = vunpack.c.l.bf16 %v228
    %v245 = vunpack.c.l.bf16 %v229
    %v246 = vunpack.c.l.bf16 %v230
    %v247 = vadd.f32 %v231, %v239
    %v248 = vadd.f32 %v232, %v240
    %v249 = vadd.f32 %v233, %v241
    %v250 = vadd.f32 %v234, %v242
    %v251 = vadd.f32 %v235, %v243
    %v252 = vadd.f32 %v236, %v244
    %v253 = vadd.f32 %v237, %v245
    %v254 = vadd.f32 %v238, %v246
    %v255 = vpack.c.bf16 %v247, %v247
    %v256 = vpack.c.bf16 %v248, %v248
    %v257 = vpack.c.bf16 %v249, %v249
    %v258 = vpack.c.bf16 %v250, %v250
    %v259 = vpack.c.bf16 %v251, %v251
    %v260 = vpack.c.bf16 %v252, %v252
    %v261 = vpack.c.bf16 %v253, %v253
    %v262 = vpack.c.bf16 %v254, %v254
    %v263 = vld [vmem:[%s2] sm:$0xf]
    %v264 = vld [vmem:[%s2 + $0x4] sm:$0xf]
    %v265 = vld [vmem:[%s2 + $0x8] sm:$0xf]
    %v266 = vld [vmem:[%s2 + $0xc] sm:$0xf]
    %v267 = vld [vmem:[%s2 + $0x10] sm:$0xf]
    %v268 = vld [vmem:[%s2 + $0x14] sm:$0xf]
    %v269 = vld [vmem:[%s2 + $0x18] sm:$0xf]
    %v270 = vld [vmem:[%s2 + $0x1c] sm:$0xf]
    %272 = vset.pattern.permute.xlu0 0
    %273 = vperm.xlu0 %272, %v263
    %v274 = vpop.permute.xlu0 %273
    %v277 = vunpack.c.l.s4 839922192
    %v278 = vunpack.c.0.s8 %v277
    %v279 = vperm.slane %v274, %v278
    %281 = vset.pattern.permute.xlu0 0
    %282 = vperm.xlu0 %281, %v264
    %v283 = vpop.permute.xlu0 %282
    %v286 = vunpack.c.l.s4 839922192
    %v287 = vunpack.c.0.s8 %v286
    %v288 = vperm.slane %v283, %v287
    %290 = vset.pattern.permute.xlu0 0
    %291 = vperm.xlu0 %290, %v265
    %v292 = vpop.permute.xlu0 %291
    %v295 = vunpack.c.l.s4 839922192
    %v296 = vunpack.c.0.s8 %v295
    %v297 = vperm.slane %v292, %v296
    %299 = vset.pattern.permute.xlu0 0
    %300 = vperm.xlu0 %299, %v266
    %v301 = vpop.permute.xlu0 %300
    %v304 = vunpack.c.l.s4 839922192
    %v305 = vunpack.c.0.s8 %v304
    %v306 = vperm.slane %v301, %v305
    %308 = vset.pattern.permute.xlu0 0
    %309 = vperm.xlu0 %308, %v267
    %v310 = vpop.permute.xlu0 %309
    %v313 = vunpack.c.l.s4 839922192
    %v314 = vunpack.c.0.s8 %v313
    %v315 = vperm.slane %v310, %v314
    %317 = vset.pattern.permute.xlu0 0
    %318 = vperm.xlu0 %317, %v268
    %v319 = vpop.permute.xlu0 %318
    %v322 = vunpack.c.l.s4 839922192
    %v323 = vunpack.c.0.s8 %v322
    %v324 = vperm.slane %v319, %v323
    %326 = vset.pattern.permute.xlu0 0
    %327 = vperm.xlu0 %326, %v269
    %v328 = vpop.permute.xlu0 %327
    %v331 = vunpack.c.l.s4 839922192
    %v332 = vunpack.c.0.s8 %v331
    %v333 = vperm.slane %v328, %v332
    %335 = vset.pattern.permute.xlu0 0
    %336 = vperm.xlu0 %335, %v270
    %v337 = vpop.permute.xlu0 %336
    %v340 = vunpack.c.l.s4 839922192
    %v341 = vunpack.c.0.s8 %v340
    %v342 = vperm.slane %v337, %v341
    %v343 = vunpack.c.l.bf16 %v255
    %v344 = vunpack.c.l.bf16 %v256
    %v345 = vunpack.c.l.bf16 %v257
    %v346 = vunpack.c.l.bf16 %v258
    %v347 = vunpack.c.l.bf16 %v259
    %v348 = vunpack.c.l.bf16 %v260
    %v349 = vunpack.c.l.bf16 %v261
    %v350 = vunpack.c.l.bf16 %v262
    %v351 = vunpack.c.l.bf16 %v279
    %v352 = vunpack.c.l.bf16 %v288
    %v353 = vunpack.c.l.bf16 %v297
    %v354 = vunpack.c.l.bf16 %v306
    %v355 = vunpack.c.l.bf16 %v315
    %v356 = vunpack.c.l.bf16 %v324
    %v357 = vunpack.c.l.bf16 %v333
    %v358 = vunpack.c.l.bf16 %v342
    %v359 = vadd.f32 %v343, %v351
    %v360 = vadd.f32 %v344, %v352
    %v361 = vadd.f32 %v345, %v353
    %v362 = vadd.f32 %v346, %v354
    %v363 = vadd.f32 %v347, %v355
    %v364 = vadd.f32 %v348, %v356
    %v365 = vadd.f32 %v349, %v357
    %v366 = vadd.f32 %v350, %v358
    %v367 = vpack.c.bf16 %v359, %v359
    %v368 = vpack.c.bf16 %v360, %v360
    %v369 = vpack.c.bf16 %v361, %v361
    %v370 = vpack.c.bf16 %v362, %v362
    %v371 = vpack.c.bf16 %v363, %v363
    %v372 = vpack.c.bf16 %v364, %v364
    %v373 = vpack.c.bf16 %v365, %v365
    %v374 = vpack.c.bf16 %v366, %v366
    %v375 = vunpack.c.l.bf16 %v367
    %v376 = vunpack.c.l.bf16 %v368
    %v377 = vunpack.c.l.bf16 %v369
    %v378 = vunpack.c.l.bf16 %v370
    %v379 = vunpack.c.l.bf16 %v371
    %v380 = vunpack.c.l.bf16 %v372
    %v381 = vunpack.c.l.bf16 %v373
    %v382 = vunpack.c.l.bf16 %v374
    %v383 = vmax.f32 %v375, 0.0
    %v384 = vmax.f32 %v376, 0.0
    %v385 = vmax.f32 %v377, 0.0
    %v386 = vmax.f32 %v378, 0.0
    %v387 = vmax.f32 %v379, 0.0
    %v388 = vmax.f32 %v380, 0.0
    %v389 = vmax.f32 %v381, 0.0
    %v390 = vmax.f32 %v382, 0.0
    %v391 = vpack.c.bf16 %v384, %v383
    %v392 = vpack.c.bf16 %v386, %v385
    %v393 = vpack.c.bf16 %v388, %v387
    %v394 = vpack.c.bf16 %v390, %v389
    %v395 = vld [vmem:[%s3] sm:$0xf]
    %v396 = vld [vmem:[%s3 + $0x4] sm:$0xf]
    %v397 = vld [vmem:[%s3 + $0x8] sm:$0xf]
    %v398 = vld [vmem:[%s3 + $0xc] sm:$0xf]
    %v399 = vld [vmem:[%s3 + $0x10] sm:$0xf]
    %v400 = vld [vmem:[%s3 + $0x14] sm:$0xf]
    %v401 = vld [vmem:[%s3 + $0x18] sm:$0xf]
    %v402 = vld [vmem:[%s3 + $0x1c] sm:$0xf]
    %v411 = vunpack.c.l.b16 %v395
    %v412 = vunpack.c.l.b16 %v396
    %v413 = vunpack.c.l.b16 %v397
    %v414 = vunpack.c.l.b16 %v398
    %v415 = vunpack.c.l.b16 %v399
    %v416 = vunpack.c.l.b16 %v400
    %v417 = vunpack.c.l.b16 %v401
    %v418 = vunpack.c.l.b16 %v402
    %v419 = vpack.c.b16 %v412, %v411
    %v420 = vpack.c.b16 %v414, %v413
    %v421 = vpack.c.b16 %v416, %v415
    %v422 = vpack.c.b16 %v418, %v417
    %vm423 = vcmask 523264
    %v425 = vsel %vm423, %v419, 0
    %v428 = vsel %vm423, %v420, 0
    %v431 = vsel %vm423, %v421, 0
    %v434 = vsel %vm423, %v422, 0
    %436 = vmatpush.bf16.msra.mxu0 0
    %437 = vmatpush.bf16.msra.mxu0 0
    %438 = vmatpush.bf16.msra.mxu0 0
    %439 = vmatpush.bf16.msra.mxu0 0
    %440 = vmatpush.bf16.msra.mxu0 %v394
    %441 = vmatpush.bf16.msra.mxu0 %v393
    %442 = vmatpush.bf16.msra.mxu0 %v392
    %443 = vmatpush.bf16.msra.mxu0 %v391
    %444 = vmatmul.bf16.gmra.mxu0 %v425
    %v445 = vpop.f32.mrf.mxu0
    %v446 = vadd.f32 0.0, %v445
    %v447 = vpop.f32.mrf.mxu0
    %v448 = vadd.f32 0.0, %v447
    %449 = vmatmul.bf16.gmra.mxu0 %v428
    %v450 = vpop.f32.mrf.mxu0
    %v451 = vadd.f32 0.0, %v450
    %v452 = vpop.f32.mrf.mxu0
    %v453 = vadd.f32 0.0, %v452
    %454 = vmatmul.bf16.gmra.mxu0 %v431
    %v455 = vpop.f32.mrf.mxu0
    %v456 = vadd.f32 0.0, %v455
    %v457 = vpop.f32.mrf.mxu0
    %v458 = vadd.f32 0.0, %v457
    %459 = vmatmul.bf16.gmra.mxu0 %v434
    %v460 = vpop.f32.mrf.mxu0
    %v461 = vadd.f32 0.0, %v460
    %v462 = vpop.f32.mrf.mxu0
    %v463 = vadd.f32 0.0, %v462
    %464 = vdwg.mxu0
    %v465 = vpack.c.bf16 %v446, %v446
    %v466 = vpack.c.bf16 %v448, %v448
    %v467 = vpack.c.bf16 %v451, %v451
    %v468 = vpack.c.bf16 %v453, %v453
    %v469 = vpack.c.bf16 %v456, %v456
    %v470 = vpack.c.bf16 %v458, %v458
    %v471 = vpack.c.bf16 %v461, %v461
    %v472 = vpack.c.bf16 %v463, %v463
    %v473 = vld [vmem:[%s4] sm:$0xf]
    %v474 = vld [vmem:[%s4 + $0x4] sm:$0xf]
    %v475 = vld [vmem:[%s4 + $0x8] sm:$0xf]
    %v476 = vld [vmem:[%s4 + $0xc] sm:$0xf]
    %v477 = vld [vmem:[%s4 + $0x10] sm:$0xf]
    %v478 = vld [vmem:[%s4 + $0x14] sm:$0xf]
    %v479 = vld [vmem:[%s4 + $0x18] sm:$0xf]
    %v480 = vld [vmem:[%s4 + $0x1c] sm:$0xf]
    %482 = vset.pattern.permute.xlu0 0
    %483 = vperm.xlu0 %482, %v473
    %v484 = vpop.permute.xlu0 %483
    %v487 = vunpack.c.l.s4 839922192
    %v488 = vunpack.c.0.s8 %v487
    %v489 = vperm.slane %v484, %v488
    %491 = vset.pattern.permute.xlu0 0
    %492 = vperm.xlu0 %491, %v474
    %v493 = vpop.permute.xlu0 %492
    %v496 = vunpack.c.l.s4 839922192
    %v497 = vunpack.c.0.s8 %v496
    %v498 = vperm.slane %v493, %v497
    %500 = vset.pattern.permute.xlu0 0
    %501 = vperm.xlu0 %500, %v475
    %v502 = vpop.permute.xlu0 %501
    %v505 = vunpack.c.l.s4 839922192
    %v506 = vunpack.c.0.s8 %v505
    %v507 = vperm.slane %v502, %v506
    %509 = vset.pattern.permute.xlu0 0
    %510 = vperm.xlu0 %509, %v476
    %v511 = vpop.permute.xlu0 %510
    %v514 = vunpack.c.l.s4 839922192
    %v515 = vunpack.c.0.s8 %v514
    %v516 = vperm.slane %v511, %v515
    %518 = vset.pattern.permute.xlu0 0
    %519 = vperm.xlu0 %518, %v477
    %v520 = vpop.permute.xlu0 %519
    %v523 = vunpack.c.l.s4 839922192
    %v524 = vunpack.c.0.s8 %v523
    %v525 = vperm.slane %v520, %v524
    %527 = vset.pattern.permute.xlu0 0
    %528 = vperm.xlu0 %527, %v478
    %v529 = vpop.permute.xlu0 %528
    %v532 = vunpack.c.l.s4 839922192
    %v533 = vunpack.c.0.s8 %v532
    %v534 = vperm.slane %v529, %v533
    %536 = vset.pattern.permute.xlu0 0
    %537 = vperm.xlu0 %536, %v479
    %v538 = vpop.permute.xlu0 %537
    %v541 = vunpack.c.l.s4 839922192
    %v542 = vunpack.c.0.s8 %v541
    %v543 = vperm.slane %v538, %v542
    %545 = vset.pattern.permute.xlu0 0
    %546 = vperm.xlu0 %545, %v480
    %v547 = vpop.permute.xlu0 %546
    %v550 = vunpack.c.l.s4 839922192
    %v551 = vunpack.c.0.s8 %v550
    %v552 = vperm.slane %v547, %v551
    %v553 = vunpack.c.l.bf16 %v465
    %v554 = vunpack.c.l.bf16 %v466
    %v555 = vunpack.c.l.bf16 %v467
    %v556 = vunpack.c.l.bf16 %v468
    %v557 = vunpack.c.l.bf16 %v469
    %v558 = vunpack.c.l.bf16 %v470
    %v559 = vunpack.c.l.bf16 %v471
    %v560 = vunpack.c.l.bf16 %v472
    %v561 = vunpack.c.l.bf16 %v489
    %v562 = vunpack.c.l.bf16 %v498
    %v563 = vunpack.c.l.bf16 %v507
    %v564 = vunpack.c.l.bf16 %v516
    %v565 = vunpack.c.l.bf16 %v525
    %v566 = vunpack.c.l.bf16 %v534
    %v567 = vunpack.c.l.bf16 %v543
    %v568 = vunpack.c.l.bf16 %v552
    %v569 = vadd.f32 %v553, %v561
    %v570 = vadd.f32 %v554, %v562
    %v571 = vadd.f32 %v555, %v563
    %v572 = vadd.f32 %v556, %v564
    %v573 = vadd.f32 %v557, %v565
    %v574 = vadd.f32 %v558, %v566
    %v575 = vadd.f32 %v559, %v567
    %v576 = vadd.f32 %v560, %v568
    %v577 = vpack.c.bf16 %v569, %v569
    %v578 = vpack.c.bf16 %v570, %v570
    %v579 = vpack.c.bf16 %v571, %v571
    %v580 = vpack.c.bf16 %v572, %v572
    %v581 = vpack.c.bf16 %v573, %v573
    %v582 = vpack.c.bf16 %v574, %v574
    %v583 = vpack.c.bf16 %v575, %v575
    %v584 = vpack.c.bf16 %v576, %v576
    %v585 = vunpack.c.l.bf16 %v577
    %v586 = vunpack.c.l.bf16 %v578
    %v587 = vunpack.c.l.bf16 %v579
    %v588 = vunpack.c.l.bf16 %v580
    %v589 = vunpack.c.l.bf16 %v581
    %v590 = vunpack.c.l.bf16 %v582
    %v591 = vunpack.c.l.bf16 %v583
    %v592 = vunpack.c.l.bf16 %v584
    %v593 = vmax.f32 %v585, 0.0
    %v594 = vmax.f32 %v586, 0.0
    %v595 = vmax.f32 %v587, 0.0
    %v596 = vmax.f32 %v588, 0.0
    %v597 = vmax.f32 %v589, 0.0
    %v598 = vmax.f32 %v590, 0.0
    %v599 = vmax.f32 %v591, 0.0
    %v600 = vmax.f32 %v592, 0.0
    %v601 = vpack.c.bf16 %v594, %v593
    %v602 = vpack.c.bf16 %v596, %v595
    %v603 = vpack.c.bf16 %v598, %v597
    %v604 = vpack.c.bf16 %v600, %v599
    %v605 = vld [vmem:[%s5] sm:$0x1]
    %v606 = vld [vmem:[%s6] sm:$0x3]
    %608 = vset.pattern.permute.xlu0 0
    %609 = vperm.xlu0 %608, %v606
    %v610 = vpop.permute.xlu0 %609
    %v613 = vsel %vm423, %v605, 0
    %615 = vmatpush.bf16.msra.mxu0 0
    %616 = vmatpush.bf16.msra.mxu0 0
    %617 = vmatpush.bf16.msra.mxu0 0
    %618 = vmatpush.bf16.msra.mxu0 0
    %619 = vmatpush.bf16.msra.mxu0 %v604
    %620 = vmatpush.bf16.msra.mxu0 %v603
    %621 = vmatpush.bf16.msra.mxu0 %v602
    %622 = vmatpush.bf16.msra.mxu0 %v601
    %623 = vmatmul.bf16.gmra.mxu0 %v613
    %v624 = vpop.f32.mrf.mxu0
    %v625 = vadd.f32 %v610, %v624
    %v626 = vpop.f32.mrf.mxu0
    %627 = vdwg.mxu0
    %628 = vst [vmem:[#allocation2] sm:$0x3] %v625
    // Predicated region
    $region30: #{tpu_custom_call.1} parent=1 // pred_check
      _
    $region31: #{tpu_custom_call.1} parent=1 // pred_check_branch
      %630 = sbr.rel (0) target = $region33
    $region32: #{tpu_custom_call.1} parent=1 // pred_region
      %632 = vsyncadd [#allocation3], 0
      %s634 = sshll.u32 [#allocation2], 4
      %s635 = int_to_ptr.vmem [resolvable:$true] %s634
      %s636 = sshll.u32 %s7, 4
      %s637 = int_to_ptr.hbm [resolvable:$true] %s636
      %639 = dma.vmem_to_hbm [thread:$0]  %s635, 32, %s637, [#allocation3]
    $region33: #{tpu_custom_call.1} parent=1 // pred_fallthru
      _
    // Predicated region
    $region34: #{tpu_custom_call.1} parent=1 // pred_check
      _
    $region35: #{tpu_custom_call.1} parent=1 // pred_check_branch
      %641 = sbr.rel (0) target = $region37
    $region36: #{tpu_custom_call.1} parent=1 // pred_region
      %643 = dma.done [#allocation3], 32
    $region37: #{tpu_custom_call.1} parent=1 // pred_fallthru
      _
    %644 = vsyncpa [#allocation3], 1

</llo_original>
